<compile_context>
chip_gen: v6e
topology: v6e:2x2x1
jax: 0.10.0
libtpu: 0.0.40
codegen_flags: <defaults>
</compile_context>

<pallas_src>
import jax
import jax.numpy as jnp
from jax.experimental import pallas as pl
from jax.experimental.pallas import tpu as pltpu


def _round_up(x, m):
    return ((x + m - 1) // m) * m


def _fc_kernel(x_ref, wt_ref, b_ref, o_ref, acc_ref):
    # x_ref : (tm, tk)   wt_ref : (tk, tn)   b_ref : (1, tn)
    # o_ref : (tm, tn)   acc_ref: (tm, tn) f32 scratch (resident across k)
    k = pl.program_id(2)

    @pl.when(k == 0)
    def _init():
        acc_ref[...] = jnp.zeros_like(acc_ref)

    acc_ref[...] += jnp.dot(
        x_ref[...], wt_ref[...], preferred_element_type=jnp.float32
    )

    @pl.when(k == pl.num_programs(2) - 1)
    def _finalize():
        o_ref[...] = (
            acc_ref[...] + b_ref[...].astype(jnp.float32)
        ).astype(o_ref.dtype)


def prepare_params(weight, bias, lane=128):
    """One-time parameter prep (outside the per-step hot path).

    weight : (num_classes, in_features)  -- PyTorch nn.Linear layout
    bias   : (num_classes,)
    returns: wt_padded (in_features, Npad), b_padded (1, Npad)
             with Npad = round_up(num_classes, 128) and zero padding,
             so the kernel output is lane-dense and no transpose is needed
             at call time.
    """
    n, f = weight.shape
    npad = _round_up(n, lane)
    wt = jnp.zeros((f, npad), weight.dtype).at[:, :n].set(weight.T)
    b2 = jnp.zeros((1, npad), bias.dtype).at[0, :n].set(bias)
    return wt, b2


def wide_classifier_forward(x_nchw, wt_padded, b_padded, num_classes):
    """Equivalent of WideClassifier.forward.

    x_nchw    : (B, C, H, W) float32, C*H*W == in_features
    wt_padded : (in_features, Npad) float32  -- from prepare_params
    b_padded  : (1, Npad) float32            -- from prepare_params
    returns   : (B, num_classes) float32
    """
    b = x_nchw.shape[0]
    f, npad = wt_padded.shape

    # torch.flatten(1): (B, C, H, W) -> (B, C*H*W). Pure reshape, no compute.
    x_flat = x_nchw.reshape(b, f)

    # Sublane-align the batch (8 rows per vreg / MXU pass).
    bp = _round_up(b, 8)
    tm = min(bp, 512)
    bp = _round_up(bp, tm)
    if bp != b:
        x_flat = jnp.pad(x_flat, ((0, bp - b), (0, 0)))

    # Reduction tiling: stream the weight in 256-wide K chunks when F is big
    # (one MXU pass on v6e/v7x), otherwise take the whole K in one block.
    tk = 256 if (f > 256 and f % 256 == 0) else f

    # Output-lane tiling: Npad is a multiple of 128 by construction.
    if npad <= 256:
        tn = npad
    elif npad % 256 == 0:
        tn = 256
    else:
        tn = 128

    grid = (bp // tm, npad // tn, f // tk)

    out = pl.pallas_call(
        _fc_kernel,
        out_shape=jax.ShapeDtypeStruct((bp, npad), x_flat.dtype),
        grid=grid,
        in_specs=[
            pl.BlockSpec((tm, tk), lambda i, j, k: (i, k)),
            pl.BlockSpec((tk, tn), lambda i, j, k: (k, j)),
            pl.BlockSpec((1, tn), lambda i, j, k: (0, j)),
        ],
        out_specs=pl.BlockSpec((tm, tn), lambda i, j, k: (i, j)),
        scratch_shapes=[pltpu.VMEM((tm, tn), jnp.float32)],
        compiler_params=pltpu.CompilerParams(
            dimension_semantics=("parallel", "parallel", "arbitrary")
        ),
    )(x_flat, wt_padded, b_padded)

    # Strip batch and class padding.
    return out[:b, :num_classes]


def init_params(key, num_classes, in_features):
    """Deterministic nn.Linear-style init: U(-1/sqrt(in), 1/sqrt(in))."""
    kw, kb = jax.random.split(key)
    bound = 1.0 / jnp.sqrt(jnp.float32(in_features))
    weight = jax.random.uniform(
        kw, (num_classes, in_features), jnp.float32, -bound, bound
    )
    bias = jax.random.uniform(kb, (num_classes,), jnp.float32, -bound, bound)
    return weight, bias


if __name__ == "__main__":
    # Small shapes consistent with the module:
    # nChannels = [8, 16, 32, 64] -> fc in_features = nChannels[3] * 4 = 256
    # x comes from a wide-resnet trunk with 2x2 spatial: (B, 64, 2, 2)
    B = 2
    c3 = 64
    H = W = 2
    num_classes = 10
    in_features = c3 * H * W  # nChannels[3] * 4

    key = jax.random.PRNGKey(0)
    kx, kp = jax.random.split(key)
    x = jax.random.normal(kx, (B, c3, H, W), jnp.float32)
    weight, bias = init_params(kp, num_classes, in_features)

    # One-time parameter prep (transpose + lane-pad), not part of the hot path.
    wt_p, b_p = prepare_params(weight, bias)

    y = wide_classifier_forward(x, wt_p, b_p, num_classes)
    y = jax.block_until_ready(y)

    # Sanity check against plain-JAX reference of the PyTorch math.
    y_ref = x.reshape(B, -1) @ weight.T + bias
    assert y.shape == (B, num_classes)
    assert jnp.allclose(y, y_ref, atol=1e-5, rtol=1e-5)

    print("KERNEL_OK")
</pallas_src>

<mosaic_0001>
module attributes {stable_mosaic.version = 11 : i64} {
  func.func @_fc_kernel(%arg0: i32, %arg1: i32, %arg2: i32, %arg3: memref<8x256xf32, #tpu.memory_space<vmem>>, %arg4: memref<256x128xf32, #tpu.memory_space<vmem>>, %arg5: memref<1x128xf32, #tpu.memory_space<vmem>>, %arg6: memref<8x128xf32, #tpu.memory_space<vmem>>, %arg7: memref<8x128xf32, #tpu.memory_space<vmem>>) attributes {dimension_semantics = [#tpu.dimension_semantics<parallel>, #tpu.dimension_semantics<parallel>, #tpu.dimension_semantics<arbitrary>], iteration_bounds = array<i64: 1, 1, 1>, scalar_prefetch = 0 : i64, scratch_operands = 1 : i64, tpu.core_type = #tpu.core_type<tc>, window_params = [{transform_indices = @transform_0, window_bounds = array<i64: 8, 256>}, {transform_indices = @transform_1, window_bounds = array<i64: 256, 128>}, {transform_indices = @transform_2, window_bounds = array<i64: 1, 128>}, {transform_indices = @transform_3, window_bounds = array<i64: 8, 128>}]} {
    %c0_i32 = arith.constant 0 : i32
    %0 = arith.cmpi eq, %arg2, %c0_i32 : i32
    %1 = arith.extui %0 : i1 to i32
    %c0_i32_0 = arith.constant 0 : i32
    %2 = arith.cmpi ne, %1, %c0_i32_0 : i32
    scf.if %2 {
      %cst_10 = arith.constant 0.000000e+00 : f32
      %12 = vector.broadcast %cst_10 : f32 to vector<8x128xf32>
      %c0_11 = arith.constant 0 : index
      %c0_12 = arith.constant 0 : index
      %13 = vector.load %arg7[%c0_11, %c0_12] : memref<8x128xf32, #tpu.memory_space<vmem>>, vector<8x128xf32>
      tpu.vector_store %arg7[%c0_11, %c0_12], %12 {strides = array<i32>} : memref<8x128xf32, #tpu.memory_space<vmem>>, vector<8x128xf32>,
    } else {
    }
    %c0 = arith.constant 0 : index
    %c0_1 = arith.constant 0 : index
    %3 = vector.load %arg7[%c0, %c0_1] : memref<8x128xf32, #tpu.memory_space<vmem>>, vector<8x128xf32>
    %c0_2 = arith.constant 0 : index
    %c0_3 = arith.constant 0 : index
    %4 = vector.load %arg3[%c0_2, %c0_3] : memref<8x256xf32, #tpu.memory_space<vmem>>, vector<8x256xf32>
    %c0_4 = arith.constant 0 : index
    %c0_5 = arith.constant 0 : index
    %5 = vector.load %arg4[%c0_4, %c0_5] : memref<256x128xf32, #tpu.memory_space<vmem>>, vector<256x128xf32>
    %cst = arith.constant dense<0.000000e+00> : vector<8x128xf32>
    %6 = tpu.matmul %4, %5, %cst {dimension_numbers = #tpu.dot_dimension_numbers<[1], [0], [0], [1], [0, 0, 1, 1], [], []>} : vector<8x256xf32>, vector<256x128xf32>, vector<8x128xf32> -> vector<8x128xf32>
    %7 = arith.addf %3, %6 : vector<8x128xf32>
    %c0_6 = arith.constant 0 : index
    %c0_7 = arith.constant 0 : index
    %8 = vector.load %arg7[%c0_6, %c0_7] : memref<8x128xf32, #tpu.memory_space<vmem>>, vector<8x128xf32>
    tpu.vector_store %arg7[%c0_6, %c0_7], %7 {strides = array<i32>} : memref<8x128xf32, #tpu.memory_space<vmem>>, vector<8x128xf32>,
    %c0_i32_8 = arith.constant 0 : i32
    %9 = arith.cmpi eq, %arg2, %c0_i32_8 : i32
    %10 = arith.extui %9 : i1 to i32
    %c0_i32_9 = arith.constant 0 : i32
    %11 = arith.cmpi ne, %10, %c0_i32_9 : i32
    scf.if %11 {
      %c0_10 = arith.constant 0 : index
      %c0_11 = arith.constant 0 : index
      %12 = vector.load %arg7[%c0_10, %c0_11] : memref<8x128xf32, #tpu.memory_space<vmem>>, vector<8x128xf32>
      %c0_12 = arith.constant 0 : index
      %c0_13 = arith.constant 0 : index
      %13 = vector.load %arg5[%c0_12, %c0_13] : memref<1x128xf32, #tpu.memory_space<vmem>>, vector<1x128xf32>
      %14 = vector.broadcast %13 : vector<1x128xf32> to vector<8x128xf32>
      %15 = arith.addf %12, %14 : vector<8x128xf32>
      %c0_14 = arith.constant 0 : index
      %c0_15 = arith.constant 0 : index
      %16 = vector.load %arg6[%c0_14, %c0_15] : memref<8x128xf32, #tpu.memory_space<vmem>>, vector<8x128xf32>
      tpu.vector_store %arg6[%c0_14, %c0_15], %15 {strides = array<i32>} : memref<8x128xf32, #tpu.memory_space<vmem>>, vector<8x128xf32>,
    } else {
    }
    return
  }
  func.func @transform_0(%arg0: i32, %arg1: i32, %arg2: i32) -> (i32, i32) {
    %c0_i32 = arith.constant 0 : i32
    return %arg0, %arg2 : i32, i32
  }
  func.func @transform_1(%arg0: i32, %arg1: i32, %arg2: i32) -> (i32, i32) {
    %c0_i32 = arith.constant 0 : i32
    return %arg2, %arg1 : i32, i32
  }
  func.func @transform_2(%arg0: i32, %arg1: i32, %arg2: i32) -> (i32, i32) {
    %c0_i32 = arith.constant 0 : i32
    %c0_i32_0 = arith.constant 0 : i32
    return %c0_i32, %arg1 : i32, i32
  }
  func.func @transform_3(%arg0: i32, %arg1: i32, %arg2: i32) -> (i32, i32) {
    %c0_i32 = arith.constant 0 : i32
    return %arg0, %arg1 : i32, i32
  }
}

</mosaic_0001>

<llo_original>
// kernel: tpu_custom_call.1
$region0: #{tpu_custom_call.1}
  #allocation0 [shape = 'u32[]', space=smem, size = 0x4, offset = 0x4, fixed_abs, tag = 'smem constant byte address 0x4 - core index']
  #allocation1 [shape = 'u32[144,128]{1,0:T(1,128)}', space=vmem, size = 0x12000, scoped, tag = 'internal scratch']
  #allocation2 [shape = 'f32[8,128]{1,0:T(8,128)}', space=vmem, size = 0x1000, scoped, tag = 'scratch operand']
  %s0 = inlined_call_operand.hbm [shape: f32[8,256], index: 0, kind: input, shape index: {}]
  %s1 = inlined_call_operand.hbm [shape: f32[256,128], index: 1, kind: input, shape index: {}]
  %s2 = inlined_call_operand.vmem [shape: f32[1,128], index: 2, kind: input, shape index: {}]
  %s3 = inlined_call_operand.hbm [shape: f32[8,128], index: 3, kind: output, shape index: {}]
  %s4 = sld [smem:[#allocation0]]
  $region38: #{tpu_custom_call.1} parent=0
    _
  %s6 = ssub.s32 1, %s4
  %s7 = scalar_select 0, %s6, %s4
  $region1: #{tpu_custom_call.1} parent=0
    #allocation3 [shape = 'u8[8192]{0}', space=vmem, size = 0x2000, scoped, tag = 'input window, operand 0, single buffered']
    #allocation4 [shape = 's32[1]{0}', space=sflag, size = 0x4, scoped, tag = 'scoped memory for tpu_custom_call.1']
    #allocation5 [shape = 's32[1]{0}', space=sflag, size = 0x4, scoped, tag = 'scoped memory for tpu_custom_call.1']
    #allocation6 [shape = 'u8[131072]{0}', space=vmem, size = 0x20000, scoped, tag = 'input window, operand 1, single buffered']
    #allocation7 [shape = 's32[1]{0}', space=sflag, size = 0x4, scoped, tag = 'scoped memory for tpu_custom_call.1']
    #allocation8 [shape = 'u8[4096]{0}', space=vmem, size = 0x1000, scoped, tag = 'output window, operand 0, single buffered']
    %8 = vsyncpa [#allocation4], 0
    %9 = vsyncpa [#allocation7], 0
    %10 = vsyncpa [#allocation5], 0
    // Predicated region
    $region2: #{tpu_custom_call.1} parent=1 // pred_check
      _
    $region3: #{tpu_custom_call.1} parent=1 // pred_check_branch
      %12 = sbr.rel (0) target = $region5
    $region4: #{tpu_custom_call.1} parent=1 // pred_region
      %s14 = ssub.s32 256, 256
      %15 = vsyncadd [#allocation4], %s14
      %s17 = sshll.u32 [#allocation3], 4
      %s18 = int_to_ptr.vmem [resolvable:$true] %s17
      %20 = dma.hbm_to_vmem [thread:$0]  %s0, 256, %s18, [#allocation4]
    $region5: #{tpu_custom_call.1} parent=1 // pred_fallthru
      _
    // Predicated region
    $region6: #{tpu_custom_call.1} parent=1 // pred_check
      _
    $region7: #{tpu_custom_call.1} parent=1 // pred_check_branch
      %22 = sbr.rel (0) target = $region9
    $region8: #{tpu_custom_call.1} parent=1 // pred_region
      %s24 = ssub.s32 4096, 4096
      %25 = vsyncadd [#allocation7], %s24
      %s26 = sshll.u32 [#allocation6], 4
      %s27 = int_to_ptr.vmem [resolvable:$true] %s26
      %32 = dma.hbm_to_vmem [thread:$0]  %s1, 4096, %s27, [#allocation7], 128, 128, 8
    $region9: #{tpu_custom_call.1} parent=1 // pred_fallthru
      _
    // Predicated region
    $region10: #{tpu_custom_call.1} parent=1 // pred_check
      _
    $region11: #{tpu_custom_call.1} parent=1 // pred_check_branch
      %34 = sbr.rel (0) target = $region13
    $region12: #{tpu_custom_call.1} parent=1 // pred_region
      _
    $region13: #{tpu_custom_call.1} parent=1 // pred_fallthru
      _
    // Predicated region
    $region14: #{tpu_custom_call.1} parent=1 // pred_check
      _
    $region15: #{tpu_custom_call.1} parent=1 // pred_check_branch
      %36 = sbr.rel (0) target = $region17
    $region16: #{tpu_custom_call.1} parent=1 // pred_region
      %37 = dma.done [#allocation4], 256
    $region17: #{tpu_custom_call.1} parent=1 // pred_fallthru
      _
    // Predicated region
    $region18: #{tpu_custom_call.1} parent=1 // pred_check
      _
    $region19: #{tpu_custom_call.1} parent=1 // pred_check_branch
      %39 = sbr.rel (0) target = $region21
    $region20: #{tpu_custom_call.1} parent=1 // pred_region
      %40 = dma.done [#allocation7], 4096
    $region21: #{tpu_custom_call.1} parent=1 // pred_fallthru
      _
    %p41 = scmp.eq.s32.totalorder 0, 0
    // Predicated region
    $region22: #{tpu_custom_call.1} parent=1 // pred_check
      %p42 = pneg %p41
    $region23: #{tpu_custom_call.1} parent=1 // pred_check_branch
      %44 = sbr.rel (%p42) target = $region25
    $region24: #{tpu_custom_call.1} parent=1 // pred_region
      %45 = vst [vmem:[#allocation2] sm:$0xff] 0.0
    $region25: #{tpu_custom_call.1} parent=1 // pred_fallthru
      _
    %v46 = vld [vmem:[#allocation2] sm:$0xff]
    %v47 = vld [vmem:[#allocation3] sm:$0xff]
    %v48 = vld [vmem:[#allocation3 + $0x8] sm:$0xff]
    %v49 = vld [vmem:[#allocation6] sm:$0xff]
    %v50 = vld [vmem:[#allocation6 + $0x8] sm:$0xff]
    %v51 = vld [vmem:[#allocation6 + $0x10] sm:$0xff]
    %v52 = vld [vmem:[#allocation6 + $0x18] sm:$0xff]
    %v53 = vld [vmem:[#allocation6 + $0x20] sm:$0xff]
    %v54 = vld [vmem:[#allocation6 + $0x28] sm:$0xff]
    %v55 = vld [vmem:[#allocation6 + $0x30] sm:$0xff]
    %v56 = vld [vmem:[#allocation6 + $0x38] sm:$0xff]
    %v57 = vld [vmem:[#allocation6 + $0x40] sm:$0xff]
    %v58 = vld [vmem:[#allocation6 + $0x48] sm:$0xff]
    %v59 = vld [vmem:[#allocation6 + $0x50] sm:$0xff]
    %v60 = vld [vmem:[#allocation6 + $0x58] sm:$0xff]
    %v61 = vld [vmem:[#allocation6 + $0x60] sm:$0xff]
    %v62 = vld [vmem:[#allocation6 + $0x68] sm:$0xff]
    %v63 = vld [vmem:[#allocation6 + $0x70] sm:$0xff]
    %v64 = vld [vmem:[#allocation6 + $0x78] sm:$0xff]
    %v65 = vld [vmem:[#allocation6 + $0x80] sm:$0xff]
    %v66 = vld [vmem:[#allocation6 + $0x88] sm:$0xff]
    %v67 = vld [vmem:[#allocation6 + $0x90] sm:$0xff]
    %v68 = vld [vmem:[#allocation6 + $0x98] sm:$0xff]
    %v69 = vld [vmem:[#allocation6 + $0xa0] sm:$0xff]
    %v70 = vld [vmem:[#allocation6 + $0xa8] sm:$0xff]
    %v71 = vld [vmem:[#allocation6 + $0xb0] sm:$0xff]
    %v72 = vld [vmem:[#allocation6 + $0xb8] sm:$0xff]
    %v73 = vld [vmem:[#allocation6 + $0xc0] sm:$0xff]
    %v74 = vld [vmem:[#allocation6 + $0xc8] sm:$0xff]
    %v75 = vld [vmem:[#allocation6 + $0xd0] sm:$0xff]
    %v76 = vld [vmem:[#allocation6 + $0xd8] sm:$0xff]
    %v77 = vld [vmem:[#allocation6 + $0xe0] sm:$0xff]
    %v78 = vld [vmem:[#allocation6 + $0xe8] sm:$0xff]
    %v79 = vld [vmem:[#allocation6 + $0xf0] sm:$0xff]
    %v80 = vld [vmem:[#allocation6 + $0xf8] sm:$0xff]
    %81 = vmatprep.subr.mxu0 0.0
    %82 = vmatpush1.msra.mxu0 %v64
    %83 = vmatprep.subr.mxu0 0.0
    %84 = vmatpush1.msra.mxu0 %v63
    %85 = vmatprep.subr.mxu0 0.0
    %86 = vmatpush1.msra.mxu0 %v62
    %87 = vmatprep.subr.mxu0 0.0
    %88 = vmatpush1.msra.mxu0 %v61
    %89 = vmatprep.subr.mxu0 0.0
    %90 = vmatpush1.msra.mxu0 %v60
    %91 = vmatprep.subr.mxu0 0.0
    %92 = vmatpush1.msra.mxu0 %v59
    %93 = vmatprep.subr.mxu0 0.0
    %94 = vmatpush1.msra.mxu0 %v58
    %95 = vmatprep.subr.mxu0 0.0
    %96 = vmatpush1.msra.mxu0 %v57
    %97 = vmatprep.subr.mxu0 0.0
    %98 = vmatpush1.msra.mxu0 %v56
    %99 = vmatprep.subr.mxu0 0.0
    %100 = vmatpush1.msra.mxu0 %v55
    %101 = vmatprep.subr.mxu0 0.0
    %102 = vmatpush1.msra.mxu0 %v54
    %103 = vmatprep.subr.mxu0 0.0
    %104 = vmatpush1.msra.mxu0 %v53
    %105 = vmatprep.subr.mxu0 0.0
    %106 = vmatpush1.msra.mxu0 %v52
    %107 = vmatprep.subr.mxu0 0.0
    %108 = vmatpush1.msra.mxu0 %v51
    %109 = vmatprep.subr.mxu0 0.0
    %110 = vmatpush1.msra.mxu0 %v50
    %111 = vmatprep.subr.mxu0 0.0
    %112 = vmatpush1.msra.mxu0 %v49
    %113 = vmatprep.subr.mxu0 0.0
    %114 = vmatpush2.msra.mxu0 %v80
    %115 = vmatprep.subr.mxu0 0.0
    %116 = vmatpush2.msra.mxu0 %v79
    %117 = vmatprep.subr.mxu0 0.0
    %118 = vmatpush2.msra.mxu0 %v78
    %119 = vmatprep.subr.mxu0 0.0
    %120 = vmatpush2.msra.mxu0 %v77
    %121 = vmatprep.subr.mxu0 0.0
    %122 = vmatpush2.msra.mxu0 %v76
    %123 = vmatprep.subr.mxu0 0.0
    %124 = vmatpush2.msra.mxu0 %v75
    %125 = vmatprep.subr.mxu0 0.0
    %126 = vmatpush2.msra.mxu0 %v74
    %127 = vmatprep.subr.mxu0 0.0
    %128 = vmatpush2.msra.mxu0 %v73
    %129 = vmatprep.subr.mxu0 0.0
    %130 = vmatpush2.msra.mxu0 %v72
    %131 = vmatprep.subr.mxu0 0.0
    %132 = vmatpush2.msra.mxu0 %v71
    %133 = vmatprep.subr.mxu0 0.0
    %134 = vmatpush2.msra.mxu0 %v70
    %135 = vmatprep.subr.mxu0 0.0
    %136 = vmatpush2.msra.mxu0 %v69
    %137 = vmatprep.subr.mxu0 0.0
    %138 = vmatpush2.msra.mxu0 %v68
    %139 = vmatprep.subr.mxu0 0.0
    %140 = vmatpush2.msra.mxu0 %v67
    %141 = vmatprep.subr.mxu0 0.0
    %142 = vmatpush2.msra.mxu0 %v66
    %143 = vmatprep.subr.mxu0 0.0
    %144 = vmatpush2.msra.mxu0 %v65
    %145 = vmatprep.mubr.f32.mxu0 %v48
    %146 = vmatmul.mubr.f32.gmra.mxu0 %v47
    %v147 = vpop.f32.mrf.mxu0
    %v148 = vadd.f32 0.0, %v147
    %v149 = vpop.f32.mrf.mxu0
    %150 = vdwg.mxu0
    %v151 = vadd.f32 %v46, %v148
    %152 = vst [vmem:[#allocation2] sm:$0xff] %v151
    // Predicated region
    $region26: #{tpu_custom_call.1} parent=1 // pred_check
      %p153 = pneg %p41
    $region27: #{tpu_custom_call.1} parent=1 // pred_check_branch
      %155 = sbr.rel (%p153) target = $region29
    $region28: #{tpu_custom_call.1} parent=1 // pred_region
      %v156 = vld [vmem:[#allocation2] sm:$0xff]
      %v157 = vld [vmem:[%s2] sm:$0x1]
      %v159 = vlaneseq
      %v160 = vshrl.u32 %v159, 7
      %v161 = vsub.s32 0, %v160
      %v162 = vrot.slane %v157, %v161
      %v164 = vadd.f32 %v156, %v162
      %165 = vst [vmem:[#allocation8] sm:$0xff] %v164
    $region29: #{tpu_custom_call.1} parent=1 // pred_fallthru
      _
    // Predicated region
    $region30: #{tpu_custom_call.1} parent=1 // pred_check
      _
    $region31: #{tpu_custom_call.1} parent=1 // pred_check_branch
      %167 = sbr.rel (0) target = $region33
    $region32: #{tpu_custom_call.1} parent=1 // pred_region
      %s169 = ssub.s32 128, 128
      %170 = vsyncadd [#allocation5], %s169
      %s172 = sshll.u32 [#allocation8], 4
      %s173 = int_to_ptr.vmem [resolvable:$true] %s172
      %175 = dma.vmem_to_hbm [thread:$0]  %s173, 128, %s3, [#allocation5]
    $region33: #{tpu_custom_call.1} parent=1 // pred_fallthru
      _
    // Predicated region
    $region34: #{tpu_custom_call.1} parent=1 // pred_check
      _
    $region35: #{tpu_custom_call.1} parent=1 // pred_check_branch
      %177 = sbr.rel (0) target = $region37
    $region36: #{tpu_custom_call.1} parent=1 // pred_region
      %178 = dma.done [#allocation5], 128
    $region37: #{tpu_custom_call.1} parent=1 // pred_fallthru
      _
    %179 = vsyncpa [#allocation4], 1
    %180 = vsyncpa [#allocation7], 1
    %181 = vsyncpa [#allocation5], 1

</llo_original>
